<compile_context>
chip_gen: v5e
topology: v5e:2x2
jax: 0.10.0
libtpu: 0.0.40
codegen_flags: <defaults>
</compile_context>

<pallas_src>
import jax
import jax.numpy as jnp
from jax.experimental import pallas as pl
from jax.experimental.pallas import tpu as pltpu

LANE = 128           # TPU lane width (last-dim vreg width)
MAX_BLOCK_ROWS = 512  # cap on (n_blk * C) rows per x tile
MAX_HW_BLOCK = 2048   # cap on H*W lanes per x tile (keeps tiles well under VMEM)


def _simple_linear_kernel(x_ref, w_ref, s_ref, b_ref, o_ref, acc_ref):
    # x_ref:   (row_blk, hw_blk)   one chunk of the flattened (N*C, H*W) input
    # w_ref:   (row_blk, out_pad)  weight.T tiled n_blk times along rows
    # s_ref:   (n_blk, row_blk)    0/1 selector summing C consecutive rows per sample
    # b_ref:   (1, out_pad)        padded bias
    # o_ref:   (n_blk, out_pad)    padded output block
    # acc_ref: (row_blk, hw_blk)   running elementwise max across H*W chunks
    k = pl.program_id(1)

    @pl.when(k == 0)
    def _():
        acc_ref[...] = x_ref[...]

    @pl.when(k > 0)
    def _():
        # Elementwise max rides the VPU and is hidden under the next-tile DMA.
        acc_ref[...] = jnp.maximum(acc_ref[...], x_ref[...])

    @pl.when(k == pl.num_programs(1) - 1)
    def _():
        # Single cross-lane reduce (XLU) per batch tile.
        pooled = jnp.max(acc_ref[...], axis=-1, keepdims=True)      # (row_blk, 1)
        prod = pooled * w_ref[...]                                   # (row_blk, out_pad), VPU
        # Sel @ prod sums the C channel-rows of each sample: == pooled(N,C) @ W^T.
        o_ref[...] = (
            jnp.dot(s_ref[...], prod, preferred_element_type=jnp.float32)
            + b_ref[...]
        ).astype(o_ref.dtype)


def _pick_n_block(n, c, max_rows=MAX_BLOCK_ROWS):
    """Largest batch block satisfying the (8,128) block rules within the row budget."""
    cand = [
        nb for nb in range(1, n + 1)
        if n % nb == 0
        and nb * c <= max_rows
        and (nb % 8 == 0 or nb == n)           # output block second-to-last dim
        and ((nb * c) % 8 == 0 or nb == n)     # x block second-to-last dim
    ]
    return max(cand) if cand else n


def prepare_simple_linear_params(weight, bias, n_blk):
    """One-time param prep (transpose / tile / pad) hoisted out of the per-call path.

    weight: (outdims, C) PyTorch nn.Linear layout; bias: (outdims,).
    Returns (w_tiled, sel, bias_pad) ready for the kernel.
    """
    outdims, c = weight.shape
    out_pad = max(LANE, pl.cdiv(outdims, LANE) * LANE)

    w_t = jnp.zeros((c, out_pad), jnp.float32).at[:, :outdims].set(weight.T)
    w_tiled = jnp.tile(w_t, (n_blk, 1))                                  # (n_blk*C, out_pad)
    sel = jnp.repeat(jnp.eye(n_blk, dtype=jnp.float32), c, axis=1)       # (n_blk, n_blk*C)
    b_pad = jnp.zeros((1, out_pad), jnp.float32).at[0, :outdims].set(bias)
    return w_tiled, sel, b_pad


def simple_linear_forward(x_nchw, w_tiled, sel, b_pad, outdims):
    """Forward pass of SimpleLinear: max-pool over full (H, W), then Linear."""
    n, c, h, w = x_nchw.shape
    n_blk = sel.shape[0]
    row_blk = n_blk * c
    out_pad = w_tiled.shape[1]

    hw = h * w
    hw_blk = min(MAX_HW_BLOCK, pl.cdiv(hw, LANE) * LANE)   # lane-aligned reduction tile
    hw_pad = pl.cdiv(hw, hw_blk) * hw_blk

    x2 = x_nchw.reshape(n * c, hw)
    if hw_pad != hw:
        # Pad with -max so the running max is unaffected by padding lanes.
        x2 = jnp.pad(x2, ((0, 0), (0, hw_pad - hw)),
                     constant_values=jnp.finfo(x2.dtype).min)

    grid = (n // n_blk, hw_pad // hw_blk)   # (batch tiles, reduction tiles) — reduction last

    out_padded = pl.pallas_call(
        _simple_linear_kernel,
        out_shape=jax.ShapeDtypeStruct((n, out_pad), jnp.float32),
        grid_spec=pltpu.PrefetchScalarGridSpec(
            num_scalar_prefetch=0,
            grid=grid,
            in_specs=[
                pl.BlockSpec((row_blk, hw_blk), lambda i, k: (i, k)),
                pl.BlockSpec((row_blk, out_pad), lambda i, k: (0, 0)),
                pl.BlockSpec((n_blk, row_blk), lambda i, k: (0, 0)),
                pl.BlockSpec((1, out_pad), lambda i, k: (0, 0)),
            ],
            out_specs=pl.BlockSpec((n_blk, out_pad), lambda i, k: (i, 0)),
            scratch_shapes=[pltpu.VMEM((row_blk, hw_blk), jnp.float32)],
        ),
        compiler_params=pltpu.CompilerParams(
            # Batch axis shards across TensorCores (v7x megacore); H*W is the reduction.
            dimension_semantics=("parallel", "arbitrary"),
            # Explicit budget: fits the v7x 32 MiB scoped / 64 MiB physical VMEM.
            vmem_limit_bytes=32 * 1024 * 1024,
        ),
        cost_estimate=pl.CostEstimate(
            flops=n * c * hw + 2 * n * c * outdims,
            transcendentals=0,
            bytes_accessed=n * c * hw * 4 + row_blk * out_pad * 4 + n * out_pad * 4,
        ),
    )(x2, w_tiled, sel, b_pad)

    return out_padded[:, :outdims]


if __name__ == "__main__":
    # Module config: in_shape = (c, w, h) = (4, 16, 16), outdims = 8, batch = 2.
    N, C, H, W = 2, 4, 16, 16
    OUTDIMS = 8

    key = jax.random.PRNGKey(0)
    kx, kw, kb = jax.random.split(key, 3)

    x = jax.random.normal(kx, (N, C, H, W), dtype=jnp.float32)
    # Deterministic synthetic parameters (PyTorch nn.Linear layout: (outdims, c)).
    weight = jax.random.normal(kw, (OUTDIMS, C), dtype=jnp.float32) * 0.1
    bias = jax.random.normal(kb, (OUTDIMS,), dtype=jnp.float32) * 0.1

    n_blk = _pick_n_block(N, C)
    w_tiled, sel, b_pad = prepare_simple_linear_params(weight, bias, n_blk)

    out = simple_linear_forward(x, w_tiled, sel, b_pad, OUTDIMS)
    jax.block_until_ready(out)

    # Pure-JAX reference of the same semantics (MaxPool2d((H,W)) + view + Linear).
    ref = jnp.max(x.reshape(N, C, -1), axis=-1) @ weight.T + bias
    assert out.shape == (N, OUTDIMS)
    assert jnp.allclose(out, ref, atol=1e-5, rtol=1e-5)

    print("KERNEL_OK")
</pallas_src>

<mosaic_0001>
module attributes {stable_mosaic.version = 11 : i64} {
  func.func @_simple_linear_kernel(%arg0: i32, %arg1: i32, %arg2: memref<8x256xf32, #tpu.memory_space<vmem>>, %arg3: memref<8x128xf32, #tpu.memory_space<vmem>>, %arg4: memref<2x8xf32, #tpu.memory_space<vmem>>, %arg5: memref<1x128xf32, #tpu.memory_space<vmem>>, %arg6: memref<2x128xf32, #tpu.memory_space<vmem>>, %arg7: memref<8x256xf32, #tpu.memory_space<vmem>>) attributes {dimension_semantics = [#tpu.dimension_semantics<parallel>, #tpu.dimension_semantics<arbitrary>], iteration_bounds = array<i64: 1, 1>, scalar_prefetch = 0 : i64, scratch_operands = 1 : i64, tpu.core_type = #tpu.core_type<tc>, window_params = [{transform_indices = @transform_0, window_bounds = array<i64: 8, 256>}, {pipeline_mode = #tpu.pipeline_mode<synchronous>, transform_indices = @transform_1, window_bounds = array<i64: 8, 128>}, {pipeline_mode = #tpu.pipeline_mode<synchronous>, transform_indices = @transform_2, window_bounds = array<i64: 2, 8>}, {pipeline_mode = #tpu.pipeline_mode<synchronous>, transform_indices = @transform_3, window_bounds = array<i64: 1, 128>}, {transform_indices = @transform_4, window_bounds = array<i64: 2, 128>}]} {
    %c0_i32 = arith.constant 0 : i32
    %0 = arith.cmpi eq, %arg1, %c0_i32 : i32
    %1 = arith.extui %0 : i1 to i32
    %c0_i32_0 = arith.constant 0 : i32
    %2 = arith.cmpi ne, %1, %c0_i32_0 : i32
    scf.if %2 {
      %c0 = arith.constant 0 : index
      %c0_5 = arith.constant 0 : index
      %9 = vector.load %arg2[%c0, %c0_5] : memref<8x256xf32, #tpu.memory_space<vmem>>, vector<8x256xf32>
      %c0_6 = arith.constant 0 : index
      %c0_7 = arith.constant 0 : index
      %10 = vector.load %arg7[%c0_6, %c0_7] : memref<8x256xf32, #tpu.memory_space<vmem>>, vector<8x256xf32>
      tpu.vector_store %arg7[%c0_6, %c0_7], %9 {strides = array<i32>} : memref<8x256xf32, #tpu.memory_space<vmem>>, vector<8x256xf32>,
    } else {
    }
    %c0_i32_1 = arith.constant 0 : i32
    %3 = arith.cmpi sgt, %arg1, %c0_i32_1 : i32
    %4 = arith.extui %3 : i1 to i32
    %c0_i32_2 = arith.constant 0 : i32
    %5 = arith.cmpi ne, %4, %c0_i32_2 : i32
    scf.if %5 {
      %c0 = arith.constant 0 : index
      %c0_5 = arith.constant 0 : index
      %9 = vector.load %arg7[%c0, %c0_5] : memref<8x256xf32, #tpu.memory_space<vmem>>, vector<8x256xf32>
      %c0_6 = arith.constant 0 : index
      %c0_7 = arith.constant 0 : index
      %10 = vector.load %arg2[%c0_6, %c0_7] : memref<8x256xf32, #tpu.memory_space<vmem>>, vector<8x256xf32>
      %11 = arith.maximumf %9, %10 : vector<8x256xf32>
      %c0_8 = arith.constant 0 : index
      %c0_9 = arith.constant 0 : index
      %12 = vector.load %arg7[%c0_8, %c0_9] : memref<8x256xf32, #tpu.memory_space<vmem>>, vector<8x256xf32>
      tpu.vector_store %arg7[%c0_8, %c0_9], %11 {strides = array<i32>} : memref<8x256xf32, #tpu.memory_space<vmem>>, vector<8x256xf32>,
    } else {
    }
    %c0_i32_3 = arith.constant 0 : i32
    %6 = arith.cmpi eq, %arg1, %c0_i32_3 : i32
    %7 = arith.extui %6 : i1 to i32
    %c0_i32_4 = arith.constant 0 : i32
    %8 = arith.cmpi ne, %7, %c0_i32_4 : i32
    scf.if %8 {
      %c0 = arith.constant 0 : index
      %c0_5 = arith.constant 0 : index
      %9 = vector.load %arg7[%c0, %c0_5] : memref<8x256xf32, #tpu.memory_space<vmem>>, vector<8x256xf32>
      %cst = arith.constant dense<0xFF800000> : vector<8xf32>
      %10 = vector.multi_reduction <maximumf>, %9, %cst [1] : vector<8x256xf32> to vector<8xf32>
      %11 = vector.shape_cast %10 : vector<8xf32> to vector<8x1xf32>
      %c0_6 = arith.constant 0 : index
      %c0_7 = arith.constant 0 : index
      %12 = vector.load %arg3[%c0_6, %c0_7] : memref<8x128xf32, #tpu.memory_space<vmem>>, vector<8x128xf32>
      %13 = vector.broadcast %11 : vector<8x1xf32> to vector<8x128xf32>
      %14 = arith.mulf %13, %12 : vector<8x128xf32>
      %c0_8 = arith.constant 0 : index
      %c0_9 = arith.constant 0 : index
      %15 = vector.load %arg4[%c0_8, %c0_9] : memref<2x8xf32, #tpu.memory_space<vmem>>, vector<2x8xf32>
      %cst_10 = arith.constant dense<0.000000e+00> : vector<2x128xf32>
      %16 = tpu.matmul %15, %14, %cst_10 {dimension_numbers = #tpu.dot_dimension_numbers<[1], [0], [0], [1], [0, 0, 1, 1], [], []>} : vector<2x8xf32>, vector<8x128xf32>, vector<2x128xf32> -> vector<2x128xf32>
      %c0_11 = arith.constant 0 : index
      %c0_12 = arith.constant 0 : index
      %17 = vector.load %arg5[%c0_11, %c0_12] : memref<1x128xf32, #tpu.memory_space<vmem>>, vector<1x128xf32>
      %18 = vector.broadcast %17 : vector<1x128xf32> to vector<2x128xf32>
      %19 = arith.addf %16, %18 : vector<2x128xf32>
      %c0_13 = arith.constant 0 : index
      %c0_14 = arith.constant 0 : index
      %20 = vector.load %arg6[%c0_13, %c0_14] : memref<2x128xf32, #tpu.memory_space<vmem>>, vector<2x128xf32>
      tpu.vector_store %arg6[%c0_13, %c0_14], %19 {strides = array<i32>} : memref<2x128xf32, #tpu.memory_space<vmem>>, vector<2x128xf32>,
    } else {
    }
    return
  }
  func.func @transform_0(%arg0: i32, %arg1: i32) -> (i32, i32) {
    %c0_i32 = arith.constant 0 : i32
    return %arg0, %arg1 : i32, i32
  }
  func.func @transform_1(%arg0: i32, %arg1: i32) -> (i32, i32) {
    %c0_i32 = arith.constant 0 : i32
    %c0_i32_0 = arith.constant 0 : i32
    %c0_i32_1 = arith.constant 0 : i32
    return %c0_i32, %c0_i32_0 : i32, i32
  }
  func.func @transform_2(%arg0: i32, %arg1: i32) -> (i32, i32) {
    %c0_i32 = arith.constant 0 : i32
    %c0_i32_0 = arith.constant 0 : i32
    %c0_i32_1 = arith.constant 0 : i32
    return %c0_i32, %c0_i32_0 : i32, i32
  }
  func.func @transform_3(%arg0: i32, %arg1: i32) -> (i32, i32) {
    %c0_i32 = arith.constant 0 : i32
    %c0_i32_0 = arith.constant 0 : i32
    %c0_i32_1 = arith.constant 0 : i32
    return %c0_i32, %c0_i32_0 : i32, i32
  }
  func.func @transform_4(%arg0: i32, %arg1: i32) -> (i32, i32) {
    %c0_i32 = arith.constant 0 : i32
    %c0_i32_0 = arith.constant 0 : i32
    return %arg0, %c0_i32 : i32, i32
  }
}

</mosaic_0001>

<llo_original>
// kernel: tpu_custom_call.1
$region0: #{tpu_custom_call.1}
  #allocation0 [shape = 'u32[]', space=smem, size = 0x4, offset = 0x4, fixed_abs, tag = 'smem constant byte address 0x4 - core index']
  #allocation1 [shape = 'u32[72,128]{1,0:T(1,128)}', space=vmem, size = 0x9000, scoped, tag = 'internal scratch']
  #allocation2 [shape = 'f32[8,256]{1,0:T(8,128)}', space=vmem, size = 0x2000, scoped, tag = 'scratch operand']
  %s0 = inlined_call_operand.hbm [shape: f32[8,256], index: 0, kind: input, shape index: {}]
  %s1 = inlined_call_operand.hbm [shape: f32[8,128], index: 1, kind: input, shape index: {}]
  %s2 = inlined_call_operand.hbm [shape: f32[2,8], index: 2, kind: input, shape index: {}]
  %s3 = inlined_call_operand.vmem [shape: f32[1,128], index: 3, kind: input, shape index: {}]
  %s4 = inlined_call_operand.hbm [shape: f32[2,128], index: 4, kind: output, shape index: {}]
  %s5 = sld [smem:[#allocation0]]
  $region50: #{tpu_custom_call.1} parent=0
    _
  %s7 = ssub.s32 1, %s5
  %s8 = scalar_select 0, %s7, %s5
  $region1: #{tpu_custom_call.1} parent=0
    #allocation3 [shape = 'u8[8192]{0}', space=vmem, size = 0x2000, scoped, tag = 'input window, operand 0, single buffered']
    #allocation4 [shape = 's32[1]{0}', space=sflag, size = 0x4, scoped, tag = 'scoped memory for tpu_custom_call.1']
    #allocation5 [shape = 's32[1]{0}', space=sflag, size = 0x4, scoped, tag = 'scoped memory for tpu_custom_call.1']
    #allocation6 [shape = 'u8[4096]{0}', space=vmem, size = 0x1000, scoped, tag = 'input window, operand 1, single buffered']
    #allocation7 [shape = 's32[1]{0}', space=sflag, size = 0x4, scoped, tag = 'scoped memory for tpu_custom_call.1']
    #allocation8 [shape = 'u8[1024]{0}', space=vmem, size = 0x400, scoped, tag = 'input window, operand 2, single buffered']
    #allocation9 [shape = 'u8[1024]{0}', space=vmem, size = 0x400, scoped, tag = 'output window, operand 0, single buffered']
    %9 = vsyncpa [#allocation4], 0
    %10 = vsyncpa [#allocation7], 0
    %11 = vsyncpa [#allocation5], 0
    // Predicated region
    $region2: #{tpu_custom_call.1} parent=1 // pred_check
      _
    $region3: #{tpu_custom_call.1} parent=1 // pred_check_branch
      %13 = sbr.rel (0) target = $region5
    $region4: #{tpu_custom_call.1} parent=1 // pred_region
      %15 = vsyncadd [#allocation4], 0
      %s17 = sshll.u32 %s0, 4
      %s18 = int_to_ptr.hbm [resolvable:$true] %s17
      %s19 = sshll.u32 [#allocation3], 4
      %s20 = int_to_ptr.vmem [resolvable:$true] %s19
      %22 = dma.hbm_to_vmem [thread:$0]  %s18, 256, %s20, [#allocation4]
    $region5: #{tpu_custom_call.1} parent=1 // pred_fallthru
      _
    // Predicated region
    $region6: #{tpu_custom_call.1} parent=1 // pred_check
      _
    $region7: #{tpu_custom_call.1} parent=1 // pred_check_branch
      %24 = sbr.rel (0) target = $region9
    $region8: #{tpu_custom_call.1} parent=1 // pred_region
      %26 = vsyncadd [#allocation7], 0
      %s28 = sshll.u32 %s1, 4
      %s29 = int_to_ptr.hbm [resolvable:$true] %s28
      %s30 = sshll.u32 [#allocation6], 4
      %s31 = int_to_ptr.vmem [resolvable:$true] %s30
      %33 = dma.hbm_to_vmem [thread:$0]  %s29, 128, %s31, [#allocation7]
    $region9: #{tpu_custom_call.1} parent=1 // pred_fallthru
      _
    // Predicated region
    $region10: #{tpu_custom_call.1} parent=1 // pred_check
      _
    $region11: #{tpu_custom_call.1} parent=1 // pred_check_branch
      %35 = sbr.rel (0) target = $region13
    $region12: #{tpu_custom_call.1} parent=1 // pred_region
      %37 = vsyncadd [#allocation7], 0
      %s39 = sshll.u32 %s2, 4
      %s40 = int_to_ptr.hbm [resolvable:$true] %s39
      %s41 = sshll.u32 [#allocation8], 4
      %s42 = int_to_ptr.vmem [resolvable:$true] %s41
      %44 = dma.hbm_to_vmem [thread:$0]  %s40, 32, %s42, [#allocation7]
    $region13: #{tpu_custom_call.1} parent=1 // pred_fallthru
      _
    // Predicated region
    $region14: #{tpu_custom_call.1} parent=1 // pred_check
      _
    $region15: #{tpu_custom_call.1} parent=1 // pred_check_branch
      %46 = sbr.rel (0) target = $region17
    $region16: #{tpu_custom_call.1} parent=1 // pred_region
      _
    $region17: #{tpu_custom_call.1} parent=1 // pred_fallthru
      _
    // Predicated region
    $region18: #{tpu_custom_call.1} parent=1 // pred_check
      _
    $region19: #{tpu_custom_call.1} parent=1 // pred_check_branch
      %48 = sbr.rel (0) target = $region21
    $region20: #{tpu_custom_call.1} parent=1 // pred_region
      %50 = dma.done [#allocation4], 256
    $region21: #{tpu_custom_call.1} parent=1 // pred_fallthru
      _
    // Predicated region
    $region22: #{tpu_custom_call.1} parent=1 // pred_check
      _
    $region23: #{tpu_custom_call.1} parent=1 // pred_check_branch
      %52 = sbr.rel (0) target = $region25
    $region24: #{tpu_custom_call.1} parent=1 // pred_region
      %54 = dma.done [#allocation7], 128
    $region25: #{tpu_custom_call.1} parent=1 // pred_fallthru
      _
    // Predicated region
    $region26: #{tpu_custom_call.1} parent=1 // pred_check
      _
    $region27: #{tpu_custom_call.1} parent=1 // pred_check_branch
      %56 = sbr.rel (0) target = $region29
    $region28: #{tpu_custom_call.1} parent=1 // pred_region
      %58 = dma.done [#allocation7], 32
    $region29: #{tpu_custom_call.1} parent=1 // pred_fallthru
      _
    %p59 = scmp.eq.s32.totalorder 0, 0
    // Predicated region
    $region30: #{tpu_custom_call.1} parent=1 // pred_check
      %p60 = pneg %p59
    $region31: #{tpu_custom_call.1} parent=1 // pred_check_branch
      %62 = sbr.rel (%p60) target = $region33
    $region32: #{tpu_custom_call.1} parent=1 // pred_region
      %v63 = vld [vmem:[#allocation3] sm:$0xff]
      %v64 = vld [vmem:[#allocation3 + $0x8] sm:$0xff]
      %65 = vst [vmem:[#allocation2] sm:$0xff] %v63
      %66 = vst [vmem:[#allocation2 + $0x8] sm:$0xff] %v64
    $region33: #{tpu_custom_call.1} parent=1 // pred_fallthru
      _
    %p67 = scmp.gt.s32.totalorder 0, 0
    // Predicated region
    $region34: #{tpu_custom_call.1} parent=1 // pred_check
      %p68 = pneg %p67
    $region35: #{tpu_custom_call.1} parent=1 // pred_check_branch
      %70 = sbr.rel (%p68) target = $region37
    $region36: #{tpu_custom_call.1} parent=1 // pred_region
      %v71 = vld [vmem:[#allocation2] sm:$0xff]
      %v72 = vld [vmem:[#allocation2 + $0x8] sm:$0xff]
      %v73 = vld [vmem:[#allocation3] sm:$0xff]
      %v74 = vld [vmem:[#allocation3 + $0x8] sm:$0xff]
      %v75 = vmax.f32 %v71, %v73
      %v76 = vmax.f32 %v72, %v74
      %77 = vst [vmem:[#allocation2] sm:$0xff] %v75
      %78 = vst [vmem:[#allocation2 + $0x8] sm:$0xff] %v76
    $region37: #{tpu_custom_call.1} parent=1 // pred_fallthru
      _
    // Predicated region
    $region38: #{tpu_custom_call.1} parent=1 // pred_check
      %p79 = pneg %p59
    $region39: #{tpu_custom_call.1} parent=1 // pred_check_branch
      %81 = sbr.rel (%p79) target = $region41
    $region40: #{tpu_custom_call.1} parent=1 // pred_region
      %v82 = vld [vmem:[#allocation2] sm:$0xff]
      %v83 = vld [vmem:[#allocation2 + $0x8] sm:$0xff]
      %v84 = vmax.f32 %v82, %v83
      %85 = vmax.xlane.f32.xlu0 %v84
      %v86 = vpop.xlane.xlu0 %85
      %v87 = vld [vmem:[#allocation6] sm:$0xff]
      %v88 = vmul.f32 %v86, %v87
      %v89 = vld [vmem:[#allocation8] sm:$0x3]
      %v90 = vld [vmem:[%s3] sm:$0x1]
      %v92 = vperm.slane %v90, 0
      %vm94 = vcmask 64512
      %v96 = vsel %vm94, %v89, 0
      %98 = vmatpush.msra.mxu0 0.0
      %99 = vmatpush.msra.mxu0 0.0
      %100 = vmatpush.msra.mxu0 0.0
      %101 = vmatpush.msra.mxu0 0.0
      %102 = vmatpush.msra.mxu0 0.0
      %103 = vmatpush.msra.mxu0 0.0
      %104 = vmatpush.msra.mxu0 0.0
      %105 = vmatpush.msra.mxu0 0.0
      %106 = vmatpush.msra.mxu0 0.0
      %107 = vmatpush.msra.mxu0 0.0
      %108 = vmatpush.msra.mxu0 0.0
      %109 = vmatpush.msra.mxu0 0.0
      %110 = vmatpush.msra.mxu0 0.0
      %111 = vmatpush.msra.mxu0 0.0
      %112 = vmatpush.msra.mxu0 0.0
      %113 = vmatpush.msra.mxu0 %v88
      %114 = vmatmul.f32.gmra.mxu0 %v96
      %v115 = vpop.f32.mrf.mxu0
      %v116 = vadd.f32 %v92, %v115
      %117 = vdwg.mxu0
      %118 = vst [vmem:[#allocation9] sm:$0x3] %v116
    $region41: #{tpu_custom_call.1} parent=1 // pred_fallthru
      _
    // Predicated region
    $region42: #{tpu_custom_call.1} parent=1 // pred_check
      _
    $region43: #{tpu_custom_call.1} parent=1 // pred_check_branch
      %120 = sbr.rel (0) target = $region45
    $region44: #{tpu_custom_call.1} parent=1 // pred_region
      %122 = vsyncadd [#allocation5], 0
      %s124 = sshll.u32 [#allocation9], 4
      %s125 = int_to_ptr.vmem [resolvable:$true] %s124
      %s126 = sshll.u32 %s4, 4
      %s127 = int_to_ptr.hbm [resolvable:$true] %s126
      %129 = dma.vmem_to_hbm [thread:$0]  %s125, 32, %s127, [#allocation5]
    $region45: #{tpu_custom_call.1} parent=1 // pred_fallthru
      _
    // Predicated region
    $region46: #{tpu_custom_call.1} parent=1 // pred_check
      _
    $region47: #{tpu_custom_call.1} parent=1 // pred_check_branch
      %131 = sbr.rel (0) target = $region49
    $region48: #{tpu_custom_call.1} parent=1 // pred_region
      %133 = dma.done [#allocation5], 32
    $region49: #{tpu_custom_call.1} parent=1 // pred_fallthru
      _
    %134 = vsyncpa [#allocation4], 1
    %135 = vsyncpa [#allocation7], 1
    %136 = vsyncpa [#allocation5], 1

</llo_original>
